<compile_context>
chip_gen: v5e
topology: v5e:2x2
jax: 0.10.0
libtpu: 0.0.40
codegen_flags: <defaults>
</compile_context>

<pallas_src>
import functools

import jax
import jax.numpy as jnp
from jax.experimental import pallas as pl
from jax.experimental.pallas import tpu as pltpu

LEAKY_SLOPE = 0.01   # nn.LeakyReLU() default negative_slope
BN_EPS = 1e-5        # nn.BatchNorm1d default eps


def _round_up(a, m):
    return (a + m - 1) // m * m


# ---------------------------------------------------------------------------
# Kernels (rows = features on sublanes, cols = batch samples on lanes)
# ---------------------------------------------------------------------------

def _accumulate_stats(i, n_real, tile_n, z, sum_ref, sq_ref):
    """Masked single-pass sum / sum-of-squares for training-mode BatchNorm."""
    col = i * tile_n + jax.lax.broadcasted_iota(jnp.int32, z.shape, 1)
    zm = jnp.where(col < n_real, z, 0.0)                       # mask padded lanes
    sum_ref[...] += jnp.sum(zm, axis=1, keepdims=True)         # (H, 1)
    sq_ref[...] += jnp.sum(zm * zm, axis=1, keepdims=True)     # (H, 1)


def first_layer_kernel(n_real, tile_n, d_in, x_ref, w_ref,
                       z_ref, sum_ref, sq_ref):
    i = pl.program_id(0)

    @pl.when(i == 0)
    def _():
        sum_ref[...] = jnp.zeros_like(sum_ref)
        sq_ref[...] = jnp.zeros_like(sq_ref)

    x = x_ref[...].astype(jnp.float32)            # (D_in, TN)
    w = w_ref[...].astype(jnp.float32)            # (H, D_in)
    if d_in <= 8:
        # Tiny contraction dim (2-3 coords): VPU outer-product accumulate is
        # cheaper than pushing a K=2 matmul through the MXU.
        z = w[:, 0:1] * x[0:1, :]
        for j in range(1, d_in):
            z = z + w[:, j:j + 1] * x[j:j + 1, :]
    else:
        z = jnp.dot(w, x, preferred_element_type=jnp.float32)

    z_ref[...] = z                                # (H, TN)
    _accumulate_stats(i, n_real, tile_n, z, sum_ref, sq_ref)


def mid_layer_kernel(n_real, tile_n, z_prev_ref, scale_ref, shift_ref, w_ref,
                     z_ref, sum_ref, sq_ref):
    i = pl.program_id(0)

    @pl.when(i == 0)
    def _():
        sum_ref[...] = jnp.zeros_like(sum_ref)
        sq_ref[...] = jnp.zeros_like(sq_ref)

    # Folded BN affine of the previous layer + LeakyReLU, then this layer's matmul.
    a = scale_ref[...] * z_prev_ref[...] + shift_ref[...]      # (H_prev, TN)
    h = jnp.where(a > 0, a, LEAKY_SLOPE * a)
    z = jnp.dot(w_ref[...], h, preferred_element_type=jnp.float32)  # (H, TN)

    z_ref[...] = z
    _accumulate_stats(i, n_real, tile_n, z, sum_ref, sq_ref)


def final_kernel(z_prev_ref, scale_ref, shift_ref, w_out_ref, b_out_ref, rho_ref):
    a = scale_ref[...] * z_prev_ref[...] + shift_ref[...]      # (H, TN)
    h = jnp.where(a > 0, a, LEAKY_SLOPE * a)
    # 1-wide output: VPU multiply + sublane (XLU) reduce instead of a 1-col MXU matmul.
    logits = jnp.sum(h * w_out_ref[...], axis=0, keepdims=True) + b_out_ref[...]
    rho_ref[...] = 0.01 + jax.nn.sigmoid(logits)               # (1, TN) lane-dense store


# ---------------------------------------------------------------------------
# Wrapper
# ---------------------------------------------------------------------------

def topnet_forward(x, params, tile_n=1024):
    """x: (N, D_in) float32.
    params: PyTorch-layout flat list
      [W0 (H,D_in), b0 (H,), g0 (H,), beta0 (H,), W1 (H,H), b1, g1, beta1, ...,
       W_out (1,H), b_out (1,)].
    Returns rho of shape (N,)."""
    n, d_in = x.shape
    num_hidden = (len(params) - 2) // 4
    h_dim = params[0].shape[0]

    tn = max(128, min(tile_n, _round_up(n, 128)))   # lane tile, multiple of 128
    n_pad = _round_up(n, tn)
    grid = (n_pad // tn,)

    col_map = lambda i: (0, i)
    const_map = lambda i: (0, 0)

    z_tile_spec = pl.BlockSpec((h_dim, tn), col_map)
    stat_spec = pl.BlockSpec((h_dim, 1), const_map)
    hidden_out_specs = (z_tile_spec, stat_spec, stat_spec)
    hidden_out_shape = (jax.ShapeDtypeStruct((h_dim, n_pad), jnp.float32),
                        jax.ShapeDtypeStruct((h_dim, 1), jnp.float32),
                        jax.ShapeDtypeStruct((h_dim, 1), jnp.float32))
    arbitrary = pltpu.CompilerParams(dimension_semantics=("arbitrary",))
    parallel = pltpu.CompilerParams(dimension_semantics=("parallel",))

    def fold_bn(s, s2, gamma, beta):
        # scale = g * rsqrt(var + eps), shift = beta - scale * mean  (tiny (H,) math)
        mean = s[:, 0] / n
        var = jnp.maximum(s2[:, 0] / n - mean * mean, 0.0)
        scale = gamma * jax.lax.rsqrt(var + BN_EPS)
        shift = beta - scale * mean
        return scale.reshape(h_dim, 1), shift.reshape(h_dim, 1)

    # Transposed, zero-padded input: (D_in, N_pad) — batch along lanes.
    xt = jnp.zeros((d_in, n_pad), jnp.float32).at[:, :n].set(x.T.astype(jnp.float32))

    # Layer 0: Linear (bias dropped — cancelled by BN) + masked stats accumulation.
    z, s, s2 = pl.pallas_call(
        functools.partial(first_layer_kernel, n, tn, d_in),
        grid=grid,
        in_specs=(pl.BlockSpec((d_in, tn), col_map),
                  pl.BlockSpec((h_dim, d_in), const_map)),
        out_specs=hidden_out_specs,
        out_shape=hidden_out_shape,
        compiler_params=arbitrary,
    )(xt, params[0].astype(jnp.float32))
    scale, shift = fold_bn(s, s2, params[2], params[3])

    # Layers 1..L-1: normalize+LeakyReLU of previous layer fused with this matmul.
    for l in range(1, num_hidden):
        z, s, s2 = pl.pallas_call(
            functools.partial(mid_layer_kernel, n, tn),
            grid=grid,
            in_specs=(z_tile_spec, stat_spec, stat_spec,
                      pl.BlockSpec((h_dim, h_dim), const_map)),
            out_specs=hidden_out_specs,
            out_shape=hidden_out_shape,
            compiler_params=arbitrary,
        )(z, scale, shift, params[4 * l].astype(jnp.float32))
        scale, shift = fold_bn(s, s2, params[4 * l + 2], params[4 * l + 3])

    # Final layer: normalize + LeakyReLU + 1-wide projection + sigmoid + 0.01.
    w_out = params[-2].astype(jnp.float32).reshape(h_dim, 1)
    b_out = params[-1].astype(jnp.float32).reshape(1, 1)
    rho_pad = pl.pallas_call(
        final_kernel,
        grid=grid,
        in_specs=(z_tile_spec, stat_spec, stat_spec, stat_spec,
                  pl.BlockSpec((1, 1), const_map)),
        out_specs=pl.BlockSpec((1, tn), col_map),
        out_shape=jax.ShapeDtypeStruct((1, n_pad), jnp.float32),
        compiler_params=parallel,
    )(z, scale, shift, w_out, b_out)

    return rho_pad[0, :n]   # matches PyTorch .view(-1)


# ---------------------------------------------------------------------------
# Parameter init (PyTorch layout) and pure-JAX reference
# ---------------------------------------------------------------------------

def init_topnet_params(key, input_dim, num_layers, num_neurons):
    """Deterministic params in PyTorch nn.Linear layout (weight = (out, in)):
    xavier_normal hidden weights, zero biases, BatchNorm gamma=1 / beta=0."""
    params = []
    current_dim = input_dim
    for _ in range(num_layers):
        key, kw = jax.random.split(key)
        std = (2.0 / (current_dim + num_neurons)) ** 0.5     # xavier_normal_
        w = std * jax.random.normal(kw, (num_neurons, current_dim), jnp.float32)
        params += [w,
                   jnp.zeros((num_neurons,), jnp.float32),   # Linear bias
                   jnp.ones((num_neurons,), jnp.float32),    # BN gamma
                   jnp.zeros((num_neurons,), jnp.float32)]   # BN beta
        current_dim = num_neurons
    key, kw = jax.random.split(key)
    std = (2.0 / (current_dim + 1)) ** 0.5
    w_out = std * jax.random.normal(kw, (1, current_dim), jnp.float32)
    b_out = jnp.zeros((1,), jnp.float32)
    params += [w_out, b_out]
    return params


def topnet_reference(x, params):
    """Pure-JAX reference of the PyTorch forward (training-mode BatchNorm1d)."""
    num_hidden = (len(params) - 2) // 4
    h = x.astype(jnp.float32)
    for l in range(num_hidden):
        w, b, g, beta = params[4 * l: 4 * l + 4]
        z = h @ w.T + b
        mean = jnp.mean(z, axis=0, keepdims=True)
        var = jnp.mean((z - mean) ** 2, axis=0, keepdims=True)
        z = g * (z - mean) / jnp.sqrt(var + BN_EPS) + beta
        h = jnp.where(z > 0, z, LEAKY_SLOPE * z)
    logits = h @ params[-2].T + params[-1]
    return (0.01 + jax.nn.sigmoid(logits)).reshape(-1)


if __name__ == "__main__":
    # Small shapes consistent with TOuNN usage: 2-D coordinate input,
    # 3 hidden layers of 32 neurons, batch of 64 sample points.
    batch = 64
    input_dim = 2
    num_layers = 3
    num_neurons = 32

    key = jax.random.PRNGKey(0)
    key, kx = jax.random.split(key)
    x = jax.random.uniform(kx, (batch, input_dim), jnp.float32)
    params = init_topnet_params(key, input_dim, num_layers, num_neurons)

    fwd = jax.jit(topnet_forward)
    rho = jax.block_until_ready(fwd(x, params))

    rho_ref = topnet_reference(x, params)
    assert rho.shape == (batch,)
    assert jnp.allclose(rho, rho_ref, atol=1e-5, rtol=1e-5), "mismatch vs reference"

    print("KERNEL_OK")
</pallas_src>

<mosaic_0001>
module attributes {stable_mosaic.version = 11 : i64} {
  func.func @final_kernel(%arg0: i32, %arg1: memref<32x128xf32, #tpu.memory_space<vmem>>, %arg2: memref<32x1xf32, #tpu.memory_space<vmem>>, %arg3: memref<32x1xf32, #tpu.memory_space<vmem>>, %arg4: memref<32x1xf32, #tpu.memory_space<vmem>>, %arg5: memref<1x1xf32, #tpu.memory_space<vmem>>, %arg6: memref<1x128xf32, #tpu.memory_space<vmem>>) attributes {dimension_semantics = [#tpu.dimension_semantics<parallel>], iteration_bounds = array<i64: 1>, scalar_prefetch = 0 : i64, scratch_operands = 0 : i64, tpu.core_type = #tpu.core_type<tc>, window_params = [{transform_indices = @transform_0, window_bounds = array<i64: 32, 128>}, {pipeline_mode = #tpu.pipeline_mode<synchronous>, transform_indices = @transform_1, window_bounds = array<i64: 32, 1>}, {pipeline_mode = #tpu.pipeline_mode<synchronous>, transform_indices = @transform_2, window_bounds = array<i64: 32, 1>}, {pipeline_mode = #tpu.pipeline_mode<synchronous>, transform_indices = @transform_3, window_bounds = array<i64: 32, 1>}, {pipeline_mode = #tpu.pipeline_mode<synchronous>, transform_indices = @transform_4, window_bounds = array<i64: 1, 1>}, {transform_indices = @transform_5, window_bounds = array<i64: 1, 128>}]} {
    %c0 = arith.constant 0 : index
    %c0_0 = arith.constant 0 : index
    %0 = vector.load %arg2[%c0, %c0_0] : memref<32x1xf32, #tpu.memory_space<vmem>>, vector<32x1xf32>
    %c0_1 = arith.constant 0 : index
    %c0_2 = arith.constant 0 : index
    %1 = vector.load %arg1[%c0_1, %c0_2] : memref<32x128xf32, #tpu.memory_space<vmem>>, vector<32x128xf32>
    %2 = vector.broadcast %0 : vector<32x1xf32> to vector<32x128xf32>
    %3 = arith.mulf %2, %1 : vector<32x128xf32>
    %c0_3 = arith.constant 0 : index
    %c0_4 = arith.constant 0 : index
    %4 = vector.load %arg3[%c0_3, %c0_4] : memref<32x1xf32, #tpu.memory_space<vmem>>, vector<32x1xf32>
    %5 = vector.broadcast %4 : vector<32x1xf32> to vector<32x128xf32>
    %6 = arith.addf %3, %5 : vector<32x128xf32>
    %cst = arith.constant 0.000000e+00 : f32
    %7 = vector.broadcast %cst : f32 to vector<32x128xf32>
    %8 = arith.cmpf ogt, %6, %7 : vector<32x128xf32>
    %cst_5 = arith.constant 0.00999999977 : f32
    %9 = vector.broadcast %cst_5 : f32 to vector<32x128xf32>
    %10 = arith.mulf %9, %6 : vector<32x128xf32>
    %11 = arith.select %8, %6, %10 : vector<32x128xi1>, vector<32x128xf32>
    %c0_6 = arith.constant 0 : index
    %c0_7 = arith.constant 0 : index
    %12 = vector.load %arg4[%c0_6, %c0_7] : memref<32x1xf32, #tpu.memory_space<vmem>>, vector<32x1xf32>
    %13 = vector.broadcast %12 : vector<32x1xf32> to vector<32x128xf32>
    %14 = arith.mulf %11, %13 : vector<32x128xf32>
    %cst_8 = arith.constant dense<0.000000e+00> : vector<128xf32>
    %15 = vector.multi_reduction <add>, %14, %cst_8 [0] : vector<32x128xf32> to vector<128xf32>
    %16 = vector.shape_cast %15 : vector<128xf32> to vector<1x128xf32>
    %c0_9 = arith.constant 0 : index
    %c0_10 = arith.constant 0 : index
    %17 = vector.load %arg5[%c0_9, %c0_10] : memref<1x1xf32, #tpu.memory_space<vmem>>, vector<1x1xf32>
    %18 = vector.broadcast %17 : vector<1x1xf32> to vector<1x128xf32>
    %19 = arith.addf %16, %18 : vector<1x128xf32>
    %20 = arith.negf %19 : vector<1x128xf32>
    %21 = math.exp %20 : vector<1x128xf32>
    %cst_11 = arith.constant 1.000000e+00 : f32
    %22 = vector.broadcast %cst_11 : f32 to vector<1x128xf32>
    %23 = arith.addf %22, %21 : vector<1x128xf32>
    %24 = arith.divf %22, %23 : vector<1x128xf32>
    %cst_12 = arith.constant 0.00999999977 : f32
    %25 = vector.broadcast %cst_12 : f32 to vector<1x128xf32>
    %26 = arith.addf %25, %24 : vector<1x128xf32>
    %c0_13 = arith.constant 0 : index
    %c0_14 = arith.constant 0 : index
    %27 = vector.load %arg6[%c0_13, %c0_14] : memref<1x128xf32, #tpu.memory_space<vmem>>, vector<1x128xf32>
    tpu.vector_store %arg6[%c0_13, %c0_14], %26 {strides = array<i32>} : memref<1x128xf32, #tpu.memory_space<vmem>>, vector<1x128xf32>,
    return
  }
  func.func @transform_0(%arg0: i32) -> (i32, i32) {
    %c0_i32 = arith.constant 0 : i32
    %c0_i32_0 = arith.constant 0 : i32
    return %c0_i32, %arg0 : i32, i32
  }
  func.func @transform_1(%arg0: i32) -> (i32, i32) {
    %c0_i32 = arith.constant 0 : i32
    %c0_i32_0 = arith.constant 0 : i32
    %c0_i32_1 = arith.constant 0 : i32
    return %c0_i32, %c0_i32_0 : i32, i32
  }
  func.func @transform_2(%arg0: i32) -> (i32, i32) {
    %c0_i32 = arith.constant 0 : i32
    %c0_i32_0 = arith.constant 0 : i32
    %c0_i32_1 = arith.constant 0 : i32
    return %c0_i32, %c0_i32_0 : i32, i32
  }
  func.func @transform_3(%arg0: i32) -> (i32, i32) {
    %c0_i32 = arith.constant 0 : i32
    %c0_i32_0 = arith.constant 0 : i32
    %c0_i32_1 = arith.constant 0 : i32
    return %c0_i32, %c0_i32_0 : i32, i32
  }
  func.func @transform_4(%arg0: i32) -> (i32, i32) {
    %c0_i32 = arith.constant 0 : i32
    %c0_i32_0 = arith.constant 0 : i32
    %c0_i32_1 = arith.constant 0 : i32
    return %c0_i32, %c0_i32_0 : i32, i32
  }
  func.func @transform_5(%arg0: i32) -> (i32, i32) {
    %c0_i32 = arith.constant 0 : i32
    %c0_i32_0 = arith.constant 0 : i32
    return %c0_i32, %arg0 : i32, i32
  }
}

module attributes {stable_mosaic.version = 11 : i64} {
  func.func @first_layer_kernel(%arg0: i32, %arg1: memref<2x128xf32, #tpu.memory_space<vmem>>, %arg2: memref<32x2xf32, #tpu.memory_space<vmem>>, %arg3: memref<32x128xf32, #tpu.memory_space<vmem>>, %arg4: memref<32x1xf32, #tpu.memory_space<vmem>>, %arg5: memref<32x1xf32, #tpu.memory_space<vmem>>) attributes {dimension_semantics = [#tpu.dimension_semantics<arbitrary>], iteration_bounds = array<i64: 1>, scalar_prefetch = 0 : i64, scratch_operands = 0 : i64, tpu.core_type = #tpu.core_type<tc>, window_params = [{transform_indices = @transform_0, window_bounds = array<i64: 2, 128>}, {pipeline_mode = #tpu.pipeline_mode<synchronous>, transform_indices = @transform_1, window_bounds = array<i64: 32, 2>}, {transform_indices = @transform_2, window_bounds = array<i64: 32, 128>}, {pipeline_mode = #tpu.pipeline_mode<synchronous>, transform_indices = @transform_3, window_bounds = array<i64: 32, 1>}, {pipeline_mode = #tpu.pipeline_mode<synchronous>, transform_indices = @transform_4, window_bounds = array<i64: 32, 1>}]} {
    %c0_i32 = arith.constant 0 : i32
    %0 = arith.cmpi eq, %arg0, %c0_i32 : i32
    %1 = arith.extui %0 : i1 to i32
    %c0_i32_0 = arith.constant 0 : i32
    %2 = arith.cmpi ne, %1, %c0_i32_0 : i32
    scf.if %2 {
      %cst_16 = arith.constant 0.000000e+00 : f32
      %36 = vector.broadcast %cst_16 : f32 to vector<32x1xf32>
      %c0_17 = arith.constant 0 : index
      %c0_18 = arith.constant 0 : index
      %37 = vector.load %arg4[%c0_17, %c0_18] : memref<32x1xf32, #tpu.memory_space<vmem>>, vector<32x1xf32>
      tpu.vector_store %arg4[%c0_17, %c0_18], %36 {strides = array<i32>} : memref<32x1xf32, #tpu.memory_space<vmem>>, vector<32x1xf32>,
      %cst_19 = arith.constant 0.000000e+00 : f32
      %38 = vector.broadcast %cst_19 : f32 to vector<32x1xf32>
      %c0_20 = arith.constant 0 : index
      %c0_21 = arith.constant 0 : index
      %39 = vector.load %arg5[%c0_20, %c0_21] : memref<32x1xf32, #tpu.memory_space<vmem>>, vector<32x1xf32>
      tpu.vector_store %arg5[%c0_20, %c0_21], %38 {strides = array<i32>} : memref<32x1xf32, #tpu.memory_space<vmem>>, vector<32x1xf32>,
    } else {
    }
    %c0 = arith.constant 0 : index
    %c0_1 = arith.constant 0 : index
    %3 = vector.load %arg1[%c0, %c0_1] : memref<2x128xf32, #tpu.memory_space<vmem>>, vector<2x128xf32>
    %c0_2 = arith.constant 0 : index
    %c0_3 = arith.constant 0 : index
    %4 = vector.load %arg2[%c0_2, %c0_3] : memref<32x2xf32, #tpu.memory_space<vmem>>, vector<32x2xf32>
    %5 = vector.extract_strided_slice %4 {offsets = [0, 0], sizes = [32, 1], strides = [1, 1]} : vector<32x2xf32> to vector<32x1xf32>
    %6 = vector.extract_strided_slice %3 {offsets = [0, 0], sizes = [1, 128], strides = [1, 1]} : vector<2x128xf32> to vector<1x128xf32>
    %7 = vector.broadcast %5 : vector<32x1xf32> to vector<32x128xf32>
    %8 = vector.broadcast %6 : vector<1x128xf32> to vector<32x128xf32>
    %9 = arith.mulf %7, %8 : vector<32x128xf32>
    %10 = vector.extract_strided_slice %4 {offsets = [0, 1], sizes = [32, 1], strides = [1, 1]} : vector<32x2xf32> to vector<32x1xf32>
    %11 = vector.extract_strided_slice %3 {offsets = [1, 0], sizes = [1, 128], strides = [1, 1]} : vector<2x128xf32> to vector<1x128xf32>
    %12 = vector.broadcast %10 : vector<32x1xf32> to vector<32x128xf32>
    %13 = vector.broadcast %11 : vector<1x128xf32> to vector<32x128xf32>
    %14 = arith.mulf %12, %13 : vector<32x128xf32>
    %15 = arith.addf %9, %14 : vector<32x128xf32>
    %c0_4 = arith.constant 0 : index
    %c0_5 = arith.constant 0 : index
    %16 = vector.load %arg3[%c0_4, %c0_5] : memref<32x128xf32, #tpu.memory_space<vmem>>, vector<32x128xf32>
    tpu.vector_store %arg3[%c0_4, %c0_5], %15 {strides = array<i32>} : memref<32x128xf32, #tpu.memory_space<vmem>>, vector<32x128xf32>,
    %c128_i32 = arith.constant 128 : i32
    %17 = arith.muli %arg0, %c128_i32 : i32
    %18 = tpu.iota {dimensions = array<i32: 1>} : vector<32x128xi32>
    %19 = vector.broadcast %17 : i32 to vector<32x128xi32>
    %20 = arith.addi %19, %18 : vector<32x128xi32>
    %c64_i32 = arith.constant 64 : i32
    %21 = vector.broadcast %c64_i32 : i32 to vector<32x128xi32>
    %22 = arith.cmpi slt, %20, %21 : vector<32x128xi32>
    %cst = arith.constant 0.000000e+00 : f32
    %23 = vector.broadcast %cst : f32 to vector<32x128xf32>
    %24 = arith.select %22, %15, %23 : vector<32x128xi1>, vector<32x128xf32>
    %c0_6 = arith.constant 0 : index
    %c0_7 = arith.constant 0 : index
    %25 = vector.load %arg4[%c0_6, %c0_7] : memref<32x1xf32, #tpu.memory_space<vmem>>, vector<32x1xf32>
    %cst_8 = arith.constant dense<0.000000e+00> : vector<32xf32>
    %26 = vector.multi_reduction <add>, %24, %cst_8 [1] : vector<32x128xf32> to vector<32xf32>
    %27 = vector.shape_cast %26 : vector<32xf32> to vector<32x1xf32>
    %28 = arith.addf %25, %27 : vector<32x1xf32>
    %c0_9 = arith.constant 0 : index
    %c0_10 = arith.constant 0 : index
    %29 = vector.load %arg4[%c0_9, %c0_10] : memref<32x1xf32, #tpu.memory_space<vmem>>, vector<32x1xf32>
    tpu.vector_store %arg4[%c0_9, %c0_10], %28 {strides = array<i32>} : memref<32x1xf32, #tpu.memory_space<vmem>>, vector<32x1xf32>,
    %c0_11 = arith.constant 0 : index
    %c0_12 = arith.constant 0 : index
    %30 = vector.load %arg5[%c0_11, %c0_12] : memref<32x1xf32, #tpu.memory_space<vmem>>, vector<32x1xf32>
    %31 = arith.mulf %24, %24 : vector<32x128xf32>
    %cst_13 = arith.constant dense<0.000000e+00> : vector<32xf32>
    %32 = vector.multi_reduction <add>, %31, %cst_13 [1] : vector<32x128xf32> to vector<32xf32>
    %33 = vector.shape_cast %32 : vector<32xf32> to vector<32x1xf32>
    %34 = arith.addf %30, %33 : vector<32x1xf32>
    %c0_14 = arith.constant 0 : index
    %c0_15 = arith.constant 0 : index
    %35 = vector.load %arg5[%c0_14, %c0_15] : memref<32x1xf32, #tpu.memory_space<vmem>>, vector<32x1xf32>
    tpu.vector_store %arg5[%c0_14, %c0_15], %34 {strides = array<i32>} : memref<32x1xf32, #tpu.memory_space<vmem>>, vector<32x1xf32>,
    return
  }
  func.func @transform_0(%arg0: i32) -> (i32, i32) {
    %c0_i32 = arith.constant 0 : i32
    %c0_i32_0 = arith.constant 0 : i32
    return %c0_i32, %arg0 : i32, i32
  }
  func.func @transform_1(%arg0: i32) -> (i32, i32) {
    %c0_i32 = arith.constant 0 : i32
    %c0_i32_0 = arith.constant 0 : i32
    %c0_i32_1 = arith.constant 0 : i32
    return %c0_i32, %c0_i32_0 : i32, i32
  }
  func.func @transform_2(%arg0: i32) -> (i32, i32) {
    %c0_i32 = arith.constant 0 : i32
    %c0_i32_0 = arith.constant 0 : i32
    return %c0_i32, %arg0 : i32, i32
  }
  func.func @transform_3(%arg0: i32) -> (i32, i32) {
    %c0_i32 = arith.constant 0 : i32
    %c0_i32_0 = arith.constant 0 : i32
    %c0_i32_1 = arith.constant 0 : i32
    return %c0_i32, %c0_i32_0 : i32, i32
  }
  func.func @transform_4(%arg0: i32) -> (i32, i32) {
    %c0_i32 = arith.constant 0 : i32
    %c0_i32_0 = arith.constant 0 : i32
    %c0_i32_1 = arith.constant 0 : i32
    return %c0_i32, %c0_i32_0 : i32, i32
  }
}

module attributes {stable_mosaic.version = 11 : i64} {
  func.func @mid_layer_kernel(%arg0: i32, %arg1: memref<32x128xf32, #tpu.memory_space<vmem>>, %arg2: memref<32x1xf32, #tpu.memory_space<vmem>>, %arg3: memref<32x1xf32, #tpu.memory_space<vmem>>, %arg4: memref<32x32xf32, #tpu.memory_space<vmem>>, %arg5: memref<32x128xf32, #tpu.memory_space<vmem>>, %arg6: memref<32x1xf32, #tpu.memory_space<vmem>>, %arg7: memref<32x1xf32, #tpu.memory_space<vmem>>) attributes {dimension_semantics = [#tpu.dimension_semantics<arbitrary>], iteration_bounds = array<i64: 1>, scalar_prefetch = 0 : i64, scratch_operands = 0 : i64, tpu.core_type = #tpu.core_type<tc>, window_params = [{transform_indices = @transform_0, window_bounds = array<i64: 32, 128>}, {pipeline_mode = #tpu.pipeline_mode<synchronous>, transform_indices = @transform_1, window_bounds = array<i64: 32, 1>}, {pipeline_mode = #tpu.pipeline_mode<synchronous>, transform_indices = @transform_2, window_bounds = array<i64: 32, 1>}, {pipeline_mode = #tpu.pipeline_mode<synchronous>, transform_indices = @transform_3, window_bounds = array<i64: 32, 32>}, {transform_indices = @transform_4, window_bounds = array<i64: 32, 128>}, {pipeline_mode = #tpu.pipeline_mode<synchronous>, transform_indices = @transform_5, window_bounds = array<i64: 32, 1>}, {pipeline_mode = #tpu.pipeline_mode<synchronous>, transform_indices = @transform_6, window_bounds = array<i64: 32, 1>}]} {
    %c0_i32 = arith.constant 0 : i32
    %0 = arith.cmpi eq, %arg0, %c0_i32 : i32
    %1 = arith.extui %0 : i1 to i32
    %c0_i32_0 = arith.constant 0 : i32
    %2 = arith.cmpi ne, %1, %c0_i32_0 : i32
    scf.if %2 {
      %cst_23 = arith.constant 0.000000e+00 : f32
      %37 = vector.broadcast %cst_23 : f32 to vector<32x1xf32>
      %c0_24 = arith.constant 0 : index
      %c0_25 = arith.constant 0 : index
      %38 = vector.load %arg6[%c0_24, %c0_25] : memref<32x1xf32, #tpu.memory_space<vmem>>, vector<32x1xf32>
      tpu.vector_store %arg6[%c0_24, %c0_25], %37 {strides = array<i32>} : memref<32x1xf32, #tpu.memory_space<vmem>>, vector<32x1xf32>,
      %cst_26 = arith.constant 0.000000e+00 : f32
      %39 = vector.broadcast %cst_26 : f32 to vector<32x1xf32>
      %c0_27 = arith.constant 0 : index
      %c0_28 = arith.constant 0 : index
      %40 = vector.load %arg7[%c0_27, %c0_28] : memref<32x1xf32, #tpu.memory_space<vmem>>, vector<32x1xf32>
      tpu.vector_store %arg7[%c0_27, %c0_28], %39 {strides = array<i32>} : memref<32x1xf32, #tpu.memory_space<vmem>>, vector<32x1xf32>,
    } else {
    }
    %c0 = arith.constant 0 : index
    %c0_1 = arith.constant 0 : index
    %3 = vector.load %arg2[%c0, %c0_1] : memref<32x1xf32, #tpu.memory_space<vmem>>, vector<32x1xf32>
    %c0_2 = arith.constant 0 : index
    %c0_3 = arith.constant 0 : index
    %4 = vector.load %arg1[%c0_2, %c0_3] : memref<32x128xf32, #tpu.memory_space<vmem>>, vector<32x128xf32>
    %5 = vector.broadcast %3 : vector<32x1xf32> to vector<32x128xf32>
    %6 = arith.mulf %5, %4 : vector<32x128xf32>
    %c0_4 = arith.constant 0 : index
    %c0_5 = arith.constant 0 : index
    %7 = vector.load %arg3[%c0_4, %c0_5] : memref<32x1xf32, #tpu.memory_space<vmem>>, vector<32x1xf32>
    %8 = vector.broadcast %7 : vector<32x1xf32> to vector<32x128xf32>
    %9 = arith.addf %6, %8 : vector<32x128xf32>
    %cst = arith.constant 0.000000e+00 : f32
    %10 = vector.broadcast %cst : f32 to vector<32x128xf32>
    %11 = arith.cmpf ogt, %9, %10 : vector<32x128xf32>
    %cst_6 = arith.constant 0.00999999977 : f32
    %12 = vector.broadcast %cst_6 : f32 to vector<32x128xf32>
    %13 = arith.mulf %12, %9 : vector<32x128xf32>
    %14 = arith.select %11, %9, %13 : vector<32x128xi1>, vector<32x128xf32>
    %c0_7 = arith.constant 0 : index
    %c0_8 = arith.constant 0 : index
    %15 = vector.load %arg4[%c0_7, %c0_8] : memref<32x32xf32, #tpu.memory_space<vmem>>, vector<32x32xf32>
    %cst_9 = arith.constant dense<0.000000e+00> : vector<32x128xf32>
    %16 = tpu.matmul %15, %14, %cst_9 {dimension_numbers = #tpu.dot_dimension_numbers<[1], [0], [0], [1], [0, 0, 1, 1], [], []>} : vector<32x32xf32>, vector<32x128xf32>, vector<32x128xf32> -> vector<32x128xf32>
    %c0_10 = arith.constant 0 : index
    %c0_11 = arith.constant 0 : index
    %17 = vector.load %arg5[%c0_10, %c0_11] : memref<32x128xf32, #tpu.memory_space<vmem>>, vector<32x128xf32>
    tpu.vector_store %arg5[%c0_10, %c0_11], %16 {strides = array<i32>} : memref<32x128xf32, #tpu.memory_space<vmem>>, vector<32x128xf32>,
    %c128_i32 = arith.constant 128 : i32
    %18 = arith.muli %arg0, %c128_i32 : i32
    %19 = tpu.iota {dimensions = array<i32: 1>} : vector<32x128xi32>
    %20 = vector.broadcast %18 : i32 to vector<32x128xi32>
    %21 = arith.addi %20, %19 : vector<32x128xi32>
    %c64_i32 = arith.constant 64 : i32
    %22 = vector.broadcast %c64_i32 : i32 to vector<32x128xi32>
    %23 = arith.cmpi slt, %21, %22 : vector<32x128xi32>
    %cst_12 = arith.constant 0.000000e+00 : f32
    %24 = vector.broadcast %cst_12 : f32 to vector<32x128xf32>
    %25 = arith.select %23, %16, %24 : vector<32x128xi1>, vector<32x128xf32>
    %c0_13 = arith.constant 0 : index
    %c0_14 = arith.constant 0 : index
    %26 = vector.load %arg6[%c0_13, %c0_14] : memref<32x1xf32, #tpu.memory_space<vmem>>, vector<32x1xf32>
    %cst_15 = arith.constant dense<0.000000e+00> : vector<32xf32>
    %27 = vector.multi_reduction <add>, %25, %cst_15 [1] : vector<32x128xf32> to vector<32xf32>
    %28 = vector.shape_cast %27 : vector<32xf32> to vector<32x1xf32>
    %29 = arith.addf %26, %28 : vector<32x1xf32>
    %c0_16 = arith.constant 0 : index
    %c0_17 = arith.constant 0 : index
    %30 = vector.load %arg6[%c0_16, %c0_17] : memref<32x1xf32, #tpu.memory_space<vmem>>, vector<32x1xf32>
    tpu.vector_store %arg6[%c0_16, %c0_17], %29 {strides = array<i32>} : memref<32x1xf32, #tpu.memory_space<vmem>>, vector<32x1xf32>,
    %c0_18 = arith.constant 0 : index
    %c0_19 = arith.constant 0 : index
    %31 = vector.load %arg7[%c0_18, %c0_19] : memref<32x1xf32, #tpu.memory_space<vmem>>, vector<32x1xf32>
    %32 = arith.mulf %25, %25 : vector<32x128xf32>
    %cst_20 = arith.constant dense<0.000000e+00> : vector<32xf32>
    %33 = vector.multi_reduction <add>, %32, %cst_20 [1] : vector<32x128xf32> to vector<32xf32>
    %34 = vector.shape_cast %33 : vector<32xf32> to vector<32x1xf32>
    %35 = arith.addf %31, %34 : vector<32x1xf32>
    %c0_21 = arith.constant 0 : index
    %c0_22 = arith.constant 0 : index
    %36 = vector.load %arg7[%c0_21, %c0_22] : memref<32x1xf32, #tpu.memory_space<vmem>>, vector<32x1xf32>
    tpu.vector_store %arg7[%c0_21, %c0_22], %35 {strides = array<i32>} : memref<32x1xf32, #tpu.memory_space<vmem>>, vector<32x1xf32>,
    return
  }
  func.func @transform_0(%arg0: i32) -> (i32, i32) {
    %c0_i32 = arith.constant 0 : i32
    %c0_i32_0 = arith.constant 0 : i32
    return %c0_i32, %arg0 : i32, i32
  }
  func.func @transform_1(%arg0: i32) -> (i32, i32) {
    %c0_i32 = arith.constant 0 : i32
    %c0_i32_0 = arith.constant 0 : i32
    %c0_i32_1 = arith.constant 0 : i32
    return %c0_i32, %c0_i32_0 : i32, i32
  }
  func.func @transform_2(%arg0: i32) -> (i32, i32) {
    %c0_i32 = arith.constant 0 : i32
    %c0_i32_0 = arith.constant 0 : i32
    %c0_i32_1 = arith.constant 0 : i32
    return %c0_i32, %c0_i32_0 : i32, i32
  }
  func.func @transform_3(%arg0: i32) -> (i32, i32) {
    %c0_i32 = arith.constant 0 : i32
    %c0_i32_0 = arith.constant 0 : i32
    %c0_i32_1 = arith.constant 0 : i32
    return %c0_i32, %c0_i32_0 : i32, i32
  }
  func.func @transform_4(%arg0: i32) -> (i32, i32) {
    %c0_i32 = arith.constant 0 : i32
    %c0_i32_0 = arith.constant 0 : i32
    return %c0_i32, %arg0 : i32, i32
  }
  func.func @transform_5(%arg0: i32) -> (i32, i32) {
    %c0_i32 = arith.constant 0 : i32
    %c0_i32_0 = arith.constant 0 : i32
    %c0_i32_1 = arith.constant 0 : i32
    return %c0_i32, %c0_i32_0 : i32, i32
  }
  func.func @transform_6(%arg0: i32) -> (i32, i32) {
    %c0_i32 = arith.constant 0 : i32
    %c0_i32_0 = arith.constant 0 : i32
    %c0_i32_1 = arith.constant 0 : i32
    return %c0_i32, %c0_i32_0 : i32, i32
  }
}

</mosaic_0001>

<llo_original>
// kernel: topnet_forward.7
$region0: #{topnet_forward.7}
  #allocation0 [shape = 'u32[]', space=smem, size = 0x4, offset = 0x4, fixed_abs, tag = 'smem constant byte address 0x4 - core index']
  #allocation1 [shape = 'u32[72,128]{1,0:T(1,128)}', space=vmem, size = 0x9000, scoped, tag = 'internal scratch']
  #allocation2 [shape = 'f32[1,1]{1,0:T(1,128)S(1)}', space=vmem, size = 0x200, scoped, tag = 'scoped memory for topnet_forward.7']
  %s0 = inlined_call_operand.vmem [shape: f32[32,128], index: 0, kind: input, shape index: {}]
  %s1 = inlined_call_operand.vmem [shape: f32[32,1], index: 1, kind: input, shape index: {}]
  %s2 = inlined_call_operand.vmem [shape: f32[32,1], index: 2, kind: input, shape index: {}]
  %s3 = inlined_call_operand.vmem [shape: f32[32,1], index: 3, kind: input, shape index: {}]
  %s4 = inlined_call_operand.<no memory space> [shape: f32[1,1], index: 4, kind: input, shape index: {}]
  %s5 = inlined_call_operand.vmem [shape: f32[1,128], index: 5, kind: output, shape index: {}]
  %s6 = sld [smem:[#allocation0]]
  $region30: #{topnet_forward.7} parent=0
    _
  %s8 = ssub.s32 1, %s6
  %s9 = scalar_select 0, %s8, %s6
  %v10 = vstv %s4
  %11 = vst [vmem:[#allocation2] sm:$0x1] %v10
  // Predicated region
  $region2: #{topnet_forward.7} parent=0 // pred_check
    _
  $region3: #{topnet_forward.7} parent=0 // pred_check_branch
    %13 = sbr.rel (0) target = $region5
  $region4: #{topnet_forward.7} parent=0 // pred_region
    _
  $region5: #{topnet_forward.7} parent=0 // pred_fallthru
    _
  // Predicated region
  $region6: #{topnet_forward.7} parent=0 // pred_check
    _
  $region7: #{topnet_forward.7} parent=0 // pred_check_branch
    %15 = sbr.rel (0) target = $region9
  $region8: #{topnet_forward.7} parent=0 // pred_region
    _
  $region9: #{topnet_forward.7} parent=0 // pred_fallthru
    _
  // Predicated region
  $region10: #{topnet_forward.7} parent=0 // pred_check
    _
  $region11: #{topnet_forward.7} parent=0 // pred_check_branch
    %17 = sbr.rel (0) target = $region13
  $region12: #{topnet_forward.7} parent=0 // pred_region
    _
  $region13: #{topnet_forward.7} parent=0 // pred_fallthru
    _
  // Predicated region
  $region14: #{topnet_forward.7} parent=0 // pred_check
    _
  $region15: #{topnet_forward.7} parent=0 // pred_check_branch
    %19 = sbr.rel (0) target = $region17
  $region16: #{topnet_forward.7} parent=0 // pred_region
    _
  $region17: #{topnet_forward.7} parent=0 // pred_fallthru
    _
  // Predicated region
  $region18: #{topnet_forward.7} parent=0 // pred_check
    _
  $region19: #{topnet_forward.7} parent=0 // pred_check_branch
    %21 = sbr.rel (0) target = $region21
  $region20: #{topnet_forward.7} parent=0 // pred_region
    _
  $region21: #{topnet_forward.7} parent=0 // pred_fallthru
    _
  %v22 = vld [vmem:[%s1] sm:$0xff]
  %v23 = vld [vmem:[%s1 + $0x8] sm:$0xff]
  %v24 = vld [vmem:[%s1 + $0x10] sm:$0xff]
  %v25 = vld [vmem:[%s1 + $0x18] sm:$0xff]
  %v26 = vld [vmem:[%s0] sm:$0xff]
  %v27 = vld [vmem:[%s0 + $0x8] sm:$0xff]
  %v28 = vld [vmem:[%s0 + $0x10] sm:$0xff]
  %v29 = vld [vmem:[%s0 + $0x18] sm:$0xff]
  %31 = vset.pattern.permute.xlu0 0
  %32 = vperm.xlu0 %31, %v22
  %v33 = vpop.permute.xlu0 %32
  %36 = vset.pattern.permute.xlu0 0
  %37 = vperm.xlu0 %36, %v23
  %v38 = vpop.permute.xlu0 %37
  %41 = vset.pattern.permute.xlu0 0
  %42 = vperm.xlu0 %41, %v24
  %v43 = vpop.permute.xlu0 %42
  %46 = vset.pattern.permute.xlu0 0
  %47 = vperm.xlu0 %46, %v25
  %v48 = vpop.permute.xlu0 %47
  %v50 = vmul.f32 %v33, %v26
  %v51 = vmul.f32 %v38, %v27
  %v52 = vmul.f32 %v43, %v28
  %v53 = vmul.f32 %v48, %v29
  %v54 = vld [vmem:[%s2] sm:$0xff]
  %v55 = vld [vmem:[%s2 + $0x8] sm:$0xff]
  %v56 = vld [vmem:[%s2 + $0x10] sm:$0xff]
  %v57 = vld [vmem:[%s2 + $0x18] sm:$0xff]
  %59 = vset.pattern.permute.xlu0 0
  %60 = vperm.xlu0 %59, %v54
  %v61 = vpop.permute.xlu0 %60
  %64 = vset.pattern.permute.xlu0 0
  %65 = vperm.xlu0 %64, %v55
  %v66 = vpop.permute.xlu0 %65
  %69 = vset.pattern.permute.xlu0 0
  %70 = vperm.xlu0 %69, %v56
  %v71 = vpop.permute.xlu0 %70
  %74 = vset.pattern.permute.xlu0 0
  %75 = vperm.xlu0 %74, %v57
  %v76 = vpop.permute.xlu0 %75
  %v78 = vadd.f32 %v50, %v61
  %v79 = vadd.f32 %v51, %v66
  %v80 = vadd.f32 %v52, %v71
  %v81 = vadd.f32 %v53, %v76
  %vm82 = vcmp.gt.f32.partialorder %v78, 0.0
  %vm83 = vcmp.gt.f32.partialorder %v79, 0.0
  %vm84 = vcmp.gt.f32.partialorder %v80, 0.0
  %vm85 = vcmp.gt.f32.partialorder %v81, 0.0
  %v86 = vmul.f32 %v78, 0.01
  %v87 = vmul.f32 %v79, 0.01
  %v88 = vmul.f32 %v80, 0.01
  %v89 = vmul.f32 %v81, 0.01
  %v90 = vsel %vm82, %v78, %v86
  %v91 = vsel %vm83, %v79, %v87
  %v92 = vsel %vm84, %v80, %v88
  %v93 = vsel %vm85, %v81, %v89
  %v94 = vld [vmem:[%s3] sm:$0xff]
  %v95 = vld [vmem:[%s3 + $0x8] sm:$0xff]
  %v96 = vld [vmem:[%s3 + $0x10] sm:$0xff]
  %v97 = vld [vmem:[%s3 + $0x18] sm:$0xff]
  %99 = vset.pattern.permute.xlu0 0
  %100 = vperm.xlu0 %99, %v94
  %v101 = vpop.permute.xlu0 %100
  %104 = vset.pattern.permute.xlu0 0
  %105 = vperm.xlu0 %104, %v95
  %v106 = vpop.permute.xlu0 %105
  %109 = vset.pattern.permute.xlu0 0
  %110 = vperm.xlu0 %109, %v96
  %v111 = vpop.permute.xlu0 %110
  %114 = vset.pattern.permute.xlu0 0
  %115 = vperm.xlu0 %114, %v97
  %v116 = vpop.permute.xlu0 %115
  %v118 = vmul.f32 %v90, %v101
  %v119 = vmul.f32 %v91, %v106
  %v120 = vmul.f32 %v92, %v111
  %v121 = vmul.f32 %v93, %v116
  %v122 = vadd.f32 %v118, %v119
  %v123 = vadd.f32 %v122, %v120
  %v124 = vadd.f32 %v123, %v121
  %v125 = vrot.slane %v124, 4
  %v126 = vadd.f32 %v124, %v125
  %v127 = vrot.slane %v126, 2
  %v128 = vadd.f32 %v126, %v127
  %v129 = vrot.slane %v128, 1
  %v130 = vadd.f32 %v128, %v129
  %v131 = vld [vmem:[#allocation2] sm:$0x1]
  %133 = vset.pattern.permute.xlu0 0
  %134 = vperm.xlu0 %133, %v131
  %v135 = vpop.permute.xlu0 %134
  %v137 = vperm.slane %v135, 0
  %v138 = vadd.f32 %v130, %v137
  %v139 = vxor.u32 %v138, 2147483648
  %v140 = vmul.f32 %v139, 1.442695
  %v141 = vpow.pop %v140
  %v142 = vadd.f32 %v141, 1.0
  %v143 = vrcp.pop %v142
  %v144 = vmul.f32 %v142, %v143
  %v145 = vsub.f32 1.0, %v144
  %v146 = vmul.f32 %v143, %v145
  %v147 = vadd.f32 %v143, %v146
  %vm148 = vweird.f32 %v142
  %vm149 = vweird.f32 %v143
  %vm150 = vmor %vm148, %vm149
  %v151 = vsel %vm150, %v143, %v147
  %v152 = vand.u32 2147483647, %v142
  %vm153 = vcmp.eq.f32.partialorder %v152, 8.507059e+37
  %v154 = vand.u32 %v142, 2147483648
  %v155 = vor.u32 1.1754944e-38, %v154
  %v156 = vsel %vm153, %v155, %v151
  %v157 = vmul.f32 1.0, %v156
  %v158 = vadd.f32 %v157, 0.01
  %159 = vst [vmem:[%s5] sm:$0x1] %v158
  // Predicated region
  $region22: #{topnet_forward.7} parent=0 // pred_check
    _
  $region23: #{topnet_forward.7} parent=0 // pred_check_branch
    %161 = sbr.rel (0) target = $region25
  $region24: #{topnet_forward.7} parent=0 // pred_region
    _
  $region25: #{topnet_forward.7} parent=0 // pred_fallthru
    _
  // Predicated region
  $region26: #{topnet_forward.7} parent=0 // pred_check
    _
  $region27: #{topnet_forward.7} parent=0 // pred_check_branch
    %163 = sbr.rel (0) target = $region29
  $region28: #{topnet_forward.7} parent=0 // pred_region
    _
  $region29: #{topnet_forward.7} parent=0 // pred_fallthru
    _

// kernel: topnet_forward.4
$region0: #{topnet_forward.4}
  #allocation0 [shape = 'u32[]', space=smem, size = 0x4, offset = 0x4, fixed_abs, tag = 'smem constant byte address 0x4 - core index']
  #allocation1 [shape = 'u32[72,128]{1,0:T(1,128)}', space=vmem, size = 0x9000, scoped, tag = 'internal scratch']
  %s0 = inlined_call_operand.vmem [shape: f32[2,128], index: 0, kind: input, shape index: {}]
  %s1 = inlined_call_operand.vmem [shape: f32[32,2], index: 1, kind: input, shape index: {}]
  %s2 = inlined_call_operand.vmem [shape: f32[32,128], index: 2, kind: output, shape index: {0}]
  %s3 = inlined_call_operand.vmem [shape: f32[32,1], index: 3, kind: output, shape index: {1}]
  %s4 = inlined_call_operand.vmem [shape: f32[32,1], index: 4, kind: output, shape index: {2}]
  %5 = xla_tuple %s2, %s3, %s4
  %s6 = sld [smem:[#allocation0]]
  $region38: #{topnet_forward.4} parent=0
    _
  %s8 = ssub.s32 1, %s6
  %s9 = scalar_select 0, %s8, %s6
  // Predicated region
  $region2: #{topnet_forward.4} parent=0 // pred_check
    _
  $region3: #{topnet_forward.4} parent=0 // pred_check_branch
    %11 = sbr.rel (0) target = $region5
  $region4: #{topnet_forward.4} parent=0 // pred_region
    _
  $region5: #{topnet_forward.4} parent=0 // pred_fallthru
    _
  // Predicated region
  $region6: #{topnet_forward.4} parent=0 // pred_check
    _
  $region7: #{topnet_forward.4} parent=0 // pred_check_branch
    %13 = sbr.rel (0) target = $region9
  $region8: #{topnet_forward.4} parent=0 // pred_region
    _
  $region9: #{topnet_forward.4} parent=0 // pred_fallthru
    _
  %p14 = scmp.eq.s32.totalorder 0, 0
  // Predicated region
  $region10: #{topnet_forward.4} parent=0 // pred_check
    %p15 = pneg %p14
  $region11: #{topnet_forward.4} parent=0 // pred_check_branch
    %17 = sbr.rel (%p15) target = $region13
  $region12: #{topnet_forward.4} parent=0 // pred_region
    %vm18 = vcmask 7168
    %19 = vst.msk [vmem:[%s3] sm:$0xff] %vm18, 0.0
    %20 = vst.msk [vmem:[%s3 + $0x8] sm:$0xff] %vm18, 0.0
    %21 = vst.msk [vmem:[%s3 + $0x10] sm:$0xff] %vm18, 0.0
    %22 = vst.msk [vmem:[%s3 + $0x18] sm:$0xff] %vm18, 0.0
    %23 = vst.msk [vmem:[%s4] sm:$0xff] %vm18, 0.0
    %24 = vst.msk [vmem:[%s4 + $0x8] sm:$0xff] %vm18, 0.0
    %25 = vst.msk [vmem:[%s4 + $0x10] sm:$0xff] %vm18, 0.0
    %26 = vst.msk [vmem:[%s4 + $0x18] sm:$0xff] %vm18, 0.0
  $region13: #{topnet_forward.4} parent=0 // pred_fallthru
    _
  %v27 = vld [vmem:[%s0] sm:$0x3]
  %v28 = vld [vmem:[%s1] sm:$0xff]
  %v29 = vld [vmem:[%s1 + $0x8] sm:$0xff]
  %v30 = vld [vmem:[%s1 + $0x10] sm:$0xff]
  %v31 = vld [vmem:[%s1 + $0x18] sm:$0xff]
  %33 = vset.pattern.permute.xlu0 0
  %34 = vperm.xlu0 %33, %v28
  %v35 = vpop.permute.xlu0 %34
  %38 = vset.pattern.permute.xlu0 0
  %39 = vperm.xlu0 %38, %v29
  %v40 = vpop.permute.xlu0 %39
  %43 = vset.pattern.permute.xlu0 0
  %44 = vperm.xlu0 %43, %v30
  %v45 = vpop.permute.xlu0 %44
  %48 = vset.pattern.permute.xlu0 0
  %49 = vperm.xlu0 %48, %v31
  %v50 = vpop.permute.xlu0 %49
  %v52 = vperm.slane %v27, 0
  %v53 = vmul.f32 %v35, %v52
  %v54 = vmul.f32 %v40, %v52
  %v55 = vmul.f32 %v45, %v52
  %v56 = vmul.f32 %v50, %v52
  %57 = vset.pattern.permute.xlu0 1
  %58 = vperm.xlu0 %57, %v28
  %v59 = vpop.permute.xlu0 %58
  %61 = vset.pattern.permute.xlu0 1
  %62 = vperm.xlu0 %61, %v29
  %v63 = vpop.permute.xlu0 %62
  %65 = vset.pattern.permute.xlu0 1
  %66 = vperm.xlu0 %65, %v30
  %v67 = vpop.permute.xlu0 %66
  %69 = vset.pattern.permute.xlu0 1
  %70 = vperm.xlu0 %69, %v31
  %v71 = vpop.permute.xlu0 %70
  %v73 = vperm.slane %v27, 1
  %v74 = vmul.f32 %v59, %v73
  %v75 = vmul.f32 %v63, %v73
  %v76 = vmul.f32 %v67, %v73
  %v77 = vmul.f32 %v71, %v73
  %v78 = vadd.f32 %v53, %v74
  %v79 = vadd.f32 %v54, %v75
  %v80 = vadd.f32 %v55, %v76
  %v81 = vadd.f32 %v56, %v77
  %82 = vst [vmem:[%s2] sm:$0xff] %v78
  %83 = vst [vmem:[%s2 + $0x8] sm:$0xff] %v79
  %84 = vst [vmem:[%s2 + $0x10] sm:$0xff] %v80
  %85 = vst [vmem:[%s2 + $0x18] sm:$0xff] %v81
  %s86 = smul.u32 0, 128
  %v87 = vlaneseq
  %v88 = vand.u32 %v87, 127
  %v89 = vstv %s86
  %v90 = vadd.s32 %v89, %v88
  %vm91 = vcmp.lt.s32.totalorder %v90, 64
  %v92 = vsel %vm91, %v78, 0.0
  %v93 = vsel %vm91, %v79, 0.0
  %v94 = vsel %vm91, %v80, 0.0
  %v95 = vsel %vm91, %v81, 0.0
  %v96 = vld [vmem:[%s3] sm:$0xff]
  %v97 = vld [vmem:[%s3 + $0x8] sm:$0xff]
  %v98 = vld [vmem:[%s3 + $0x10] sm:$0xff]
  %v99 = vld [vmem:[%s3 + $0x18] sm:$0xff]
  %100 = vadd.xlane.f32.xlu0 %v92
  %v101 = vpop.xlane.xlu0 %100
  %102 = vadd.xlane.f32.xlu0 %v93
  %v103 = vpop.xlane.xlu0 %102
  %104 = vadd.xlane.f32.xlu0 %v94
  %v105 = vpop.xlane.xlu0 %104
  %106 = vadd.xlane.f32.xlu0 %v95
  %v107 = vpop.xlane.xlu0 %106
  %v108 = vadd.f32 %v96, %v101
  %v109 = vadd.f32 %v97, %v103
  %v110 = vadd.f32 %v98, %v105
  %v111 = vadd.f32 %v99, %v107
  %vm112 = vcmask 7168
  %113 = vst.msk [vmem:[%s3] sm:$0xff] %vm112, %v108
  %114 = vst.msk [vmem:[%s3 + $0x8] sm:$0xff] %vm112, %v109
  %115 = vst.msk [vmem:[%s3 + $0x10] sm:$0xff] %vm112, %v110
  %116 = vst.msk [vmem:[%s3 + $0x18] sm:$0xff] %vm112, %v111
  %v117 = vld [vmem:[%s4] sm:$0xff]
  %v118 = vld [vmem:[%s4 + $0x8] sm:$0xff]
  %v119 = vld [vmem:[%s4 + $0x10] sm:$0xff]
  %v120 = vld [vmem:[%s4 + $0x18] sm:$0xff]
  %v121 = vmul.f32 %v92, %v92
  %v122 = vmul.f32 %v93, %v93
  %v123 = vmul.f32 %v94, %v94
  %v124 = vmul.f32 %v95, %v95
  %125 = vadd.xlane.f32.xlu0 %v121
  %v126 = vpop.xlane.xlu0 %125
  %127 = vadd.xlane.f32.xlu0 %v122
  %v128 = vpop.xlane.xlu0 %127
  %129 = vadd.xlane.f32.xlu0 %v123
  %v130 = vpop.xlane.xlu0 %129
  %131 = vadd.xlane.f32.xlu0 %v124
  %v132 = vpop.xlane.xlu0 %131
  %v133 = vadd.f32 %v117, %v126
  %v134 = vadd.f32 %v118, %v128
  %v135 = vadd.f32 %v119, %v130
  %v136 = vadd.f32 %v120, %v132
  %137 = vst.msk [vmem:[%s4] sm:$0xff] %vm112, %v133
  %138 = vst.msk [vmem:[%s4 + $0x8] sm:$0xff] %vm112, %v134
  %139 = vst.msk [vmem:[%s4 + $0x10] sm:$0xff] %vm112, %v135
  %140 = vst.msk [vmem:[%s4 + $0x18] sm:$0xff] %vm112, %v136
  // Predicated region
  $region14: #{topnet_forward.4} parent=0 // pred_check
    _
  $region15: #{topnet_forward.4} parent=0 // pred_check_branch
    %142 = sbr.rel (0) target = $region17
  $region16: #{topnet_forward.4} parent=0 // pred_region
    _
  $region17: #{topnet_forward.4} parent=0 // pred_fallthru
    _
  // Predicated region
  $region18: #{topnet_forward.4} parent=0 // pred_check
    _
  $region19: #{topnet_forward.4} parent=0 // pred_check_branch
    %144 = sbr.rel (0) target = $region21
  $region20: #{topnet_forward.4} parent=0 // pred_region
    _
  $region21: #{topnet_forward.4} parent=0 // pred_fallthru
    _
  // Predicated region
  $region22: #{topnet_forward.4} parent=0 // pred_check
    _
  $region23: #{topnet_forward.4} parent=0 // pred_check_branch
    %146 = sbr.rel (0) target = $region25
  $region24: #{topnet_forward.4} parent=0 // pred_region
    _
  $region25: #{topnet_forward.4} parent=0 // pred_fallthru
    _
  // Predicated region
  $region26: #{topnet_forward.4} parent=0 // pred_check
    _
  $region27: #{topnet_forward.4} parent=0 // pred_check_branch
    %148 = sbr.rel (0) target = $region29
  $region28: #{topnet_forward.4} parent=0 // pred_region
    _
  $region29: #{topnet_forward.4} parent=0 // pred_fallthru
    _
  // Predicated region
  $region30: #{topnet_forward.4} parent=0 // pred_check
    _
  $region31: #{topnet_forward.4} parent=0 // pred_check_branch
    %150 = sbr.rel (0) target = $region33
  $region32: #{topnet_forward.4} parent=0 // pred_region
    _
  $region33: #{topnet_forward.4} parent=0 // pred_fallthru
    _
  // Predicated region
  $region34: #{topnet_forward.4} parent=0 // pred_check
    _
  $region35: #{topnet_forward.4} parent=0 // pred_check_branch
    %152 = sbr.rel (0) target = $region37
  $region36: #{topnet_forward.4} parent=0 // pred_region
    _
  $region37: #{topnet_forward.4} parent=0 // pred_fallthru
    _

// kernel: topnet_forward.5
$region0: #{topnet_forward.5}
  #allocation0 [shape = 'u32[]', space=smem, size = 0x4, offset = 0x4, fixed_abs, tag = 'smem constant byte address 0x4 - core index']
  #allocation1 [shape = 'u32[72,128]{1,0:T(1,128)}', space=vmem, size = 0x9000, scoped, tag = 'internal scratch']
  %s0 = inlined_call_operand.vmem [shape: f32[32,128], index: 0, kind: input, shape index: {}]
  %s1 = inlined_call_operand.vmem [shape: f32[32,1], index: 1, kind: input, shape index: {}]
  %s2 = inlined_call_operand.vmem [shape: f32[32,1], index: 2, kind: input, shape index: {}]
  %s3 = inlined_call_operand.vmem [shape: f32[32,32], index: 3, kind: input, shape index: {}]
  %s4 = inlined_call_operand.vmem [shape: f32[32,128], index: 4, kind: output, shape index: {0}]
  %s5 = inlined_call_operand.vmem [shape: f32[32,1], index: 5, kind: output, shape index: {1}]
  %s6 = inlined_call_operand.vmem [shape: f32[32,1], index: 6, kind: output, shape index: {2}]
  %7 = xla_tuple %s4, %s5, %s6
  %s8 = sld [smem:[#allocation0]]
  $region46: #{topnet_forward.5} parent=0
    _
  %s10 = ssub.s32 1, %s8
  %s11 = scalar_select 0, %s10, %s8
  // Predicated region
  $region2: #{topnet_forward.5} parent=0 // pred_check
    _
  $region3: #{topnet_forward.5} parent=0 // pred_check_branch
    %13 = sbr.rel (0) target = $region5
  $region4: #{topnet_forward.5} parent=0 // pred_region
    _
  $region5: #{topnet_forward.5} parent=0 // pred_fallthru
    _
  // Predicated region
  $region6: #{topnet_forward.5} parent=0 // pred_check
    _
  $region7: #{topnet_forward.5} parent=0 // pred_check_branch
    %15 = sbr.rel (0) target = $region9
  $region8: #{topnet_forward.5} parent=0 // pred_region
    _
  $region9: #{topnet_forward.5} parent=0 // pred_fallthru
    _
  // Predicated region
  $region10: #{topnet_forward.5} parent=0 // pred_check
    _
  $region11: #{topnet_forward.5} parent=0 // pred_check_branch
    %17 = sbr.rel (0) target = $region13
  $region12: #{topnet_forward.5} parent=0 // pred_region
    _
  $region13: #{topnet_forward.5} parent=0 // pred_fallthru
    _
  // Predicated region
  $region14: #{topnet_forward.5} parent=0 // pred_check
    _
  $region15: #{topnet_forward.5} parent=0 // pred_check_branch
    %19 = sbr.rel (0) target = $region17
  $region16: #{topnet_forward.5} parent=0 // pred_region
    _
  $region17: #{topnet_forward.5} parent=0 // pred_fallthru
    _
  %p20 = scmp.eq.s32.totalorder 0, 0
  // Predicated region
  $region18: #{topnet_forward.5} parent=0 // pred_check
    %p21 = pneg %p20
  $region19: #{topnet_forward.5} parent=0 // pred_check_branch
    %23 = sbr.rel (%p21) target = $region21
  $region20: #{topnet_forward.5} parent=0 // pred_region
    %vm24 = vcmask 7168
    %25 = vst.msk [vmem:[%s5] sm:$0xff] %vm24, 0.0
    %26 = vst.msk [vmem:[%s5 + $0x8] sm:$0xff] %vm24, 0.0
    %27 = vst.msk [vmem:[%s5 + $0x10] sm:$0xff] %vm24, 0.0
    %28 = vst.msk [vmem:[%s5 + $0x18] sm:$0xff] %vm24, 0.0
    %29 = vst.msk [vmem:[%s6] sm:$0xff] %vm24, 0.0
    %30 = vst.msk [vmem:[%s6 + $0x8] sm:$0xff] %vm24, 0.0
    %31 = vst.msk [vmem:[%s6 + $0x10] sm:$0xff] %vm24, 0.0
    %32 = vst.msk [vmem:[%s6 + $0x18] sm:$0xff] %vm24, 0.0
  $region21: #{topnet_forward.5} parent=0 // pred_fallthru
    _
  %v33 = vld [vmem:[%s1] sm:$0xff]
  %v34 = vld [vmem:[%s1 + $0x8] sm:$0xff]
  %v35 = vld [vmem:[%s1 + $0x10] sm:$0xff]
  %v36 = vld [vmem:[%s1 + $0x18] sm:$0xff]
  %v37 = vld [vmem:[%s0] sm:$0xff]
  %v38 = vld [vmem:[%s0 + $0x8] sm:$0xff]
  %v39 = vld [vmem:[%s0 + $0x10] sm:$0xff]
  %v40 = vld [vmem:[%s0 + $0x18] sm:$0xff]
  %42 = vset.pattern.permute.xlu0 0
  %43 = vperm.xlu0 %42, %v33
  %v44 = vpop.permute.xlu0 %43
  %47 = vset.pattern.permute.xlu0 0
  %48 = vperm.xlu0 %47, %v34
  %v49 = vpop.permute.xlu0 %48
  %52 = vset.pattern.permute.xlu0 0
  %53 = vperm.xlu0 %52, %v35
  %v54 = vpop.permute.xlu0 %53
  %57 = vset.pattern.permute.xlu0 0
  %58 = vperm.xlu0 %57, %v36
  %v59 = vpop.permute.xlu0 %58
  %v61 = vmul.f32 %v44, %v37
  %v62 = vmul.f32 %v49, %v38
  %v63 = vmul.f32 %v54, %v39
  %v64 = vmul.f32 %v59, %v40
  %v65 = vld [vmem:[%s2] sm:$0xff]
  %v66 = vld [vmem:[%s2 + $0x8] sm:$0xff]
  %v67 = vld [vmem:[%s2 + $0x10] sm:$0xff]
  %v68 = vld [vmem:[%s2 + $0x18] sm:$0xff]
  %70 = vset.pattern.permute.xlu0 0
  %71 = vperm.xlu0 %70, %v65
  %v72 = vpop.permute.xlu0 %71
  %75 = vset.pattern.permute.xlu0 0
  %76 = vperm.xlu0 %75, %v66
  %v77 = vpop.permute.xlu0 %76
  %80 = vset.pattern.permute.xlu0 0
  %81 = vperm.xlu0 %80, %v67
  %v82 = vpop.permute.xlu0 %81
  %85 = vset.pattern.permute.xlu0 0
  %86 = vperm.xlu0 %85, %v68
  %v87 = vpop.permute.xlu0 %86
  %v89 = vadd.f32 %v61, %v72
  %v90 = vadd.f32 %v62, %v77
  %v91 = vadd.f32 %v63, %v82
  %v92 = vadd.f32 %v64, %v87
  %vm93 = vcmp.gt.f32.partialorder %v89, 0.0
  %vm94 = vcmp.gt.f32.partialorder %v90, 0.0
  %vm95 = vcmp.gt.f32.partialorder %v91, 0.0
  %vm96 = vcmp.gt.f32.partialorder %v92, 0.0
  %v97 = vmul.f32 %v89, 0.01
  %v98 = vmul.f32 %v90, 0.01
  %v99 = vmul.f32 %v91, 0.01
  %v100 = vmul.f32 %v92, 0.01
  %v101 = vsel %vm93, %v89, %v97
  %v102 = vsel %vm94, %v90, %v98
  %v103 = vsel %vm95, %v91, %v99
  %v104 = vsel %vm96, %v92, %v100
  %v105 = vld [vmem:[%s3] sm:$0xff]
  %v106 = vld [vmem:[%s3 + $0x8] sm:$0xff]
  %v107 = vld [vmem:[%s3 + $0x10] sm:$0xff]
  %v108 = vld [vmem:[%s3 + $0x18] sm:$0xff]
  %vm109 = vcmask 261120
  %v111 = vsel %vm109, %v105, 0
  %v114 = vsel %vm109, %v106, 0
  %v117 = vsel %vm109, %v107, 0
  %v120 = vsel %vm109, %v108, 0
  %122 = vmatpush.msra.mxu0 0.0
  %123 = vmatpush.msra.mxu0 0.0
  %124 = vmatpush.msra.mxu0 0.0
  %125 = vmatpush.msra.mxu0 0.0
  %126 = vmatpush.msra.mxu0 0.0
  %127 = vmatpush.msra.mxu0 0.0
  %128 = vmatpush.msra.mxu0 0.0
  %129 = vmatpush.msra.mxu0 0.0
  %130 = vmatpush.msra.mxu0 0.0
  %131 = vmatpush.msra.mxu0 0.0
  %132 = vmatpush.msra.mxu0 0.0
  %133 = vmatpush.msra.mxu0 0.0
  %134 = vmatpush.msra.mxu0 %v104
  %135 = vmatpush.msra.mxu0 %v103
  %136 = vmatpush.msra.mxu0 %v102
  %137 = vmatpush.msra.mxu0 %v101
  %138 = vmatmul.f32.gmra.mxu0 %v111
  %v139 = vpop.f32.mrf.mxu0
  %v140 = vadd.f32 0.0, %v139
  %141 = vmatmul.f32.gmra.mxu0 %v114
  %v142 = vpop.f32.mrf.mxu0
  %v143 = vadd.f32 0.0, %v142
  %144 = vmatmul.f32.gmra.mxu0 %v117
  %v145 = vpop.f32.mrf.mxu0
  %v146 = vadd.f32 0.0, %v145
  %147 = vmatmul.f32.gmra.mxu0 %v120
  %v148 = vpop.f32.mrf.mxu0
  %v149 = vadd.f32 0.0, %v148
  %150 = vdwg.mxu0
  %151 = vst [vmem:[%s4] sm:$0xff] %v140
  %152 = vst [vmem:[%s4 + $0x8] sm:$0xff] %v143
  %153 = vst [vmem:[%s4 + $0x10] sm:$0xff] %v146
  %154 = vst [vmem:[%s4 + $0x18] sm:$0xff] %v149
  %s155 = smul.u32 0, 128
  %v156 = vlaneseq
  %v157 = vand.u32 %v156, 127
  %v158 = vstv %s155
  %v159 = vadd.s32 %v158, %v157
  %vm160 = vcmp.lt.s32.totalorder %v159, 64
  %v161 = vsel %vm160, %v140, 0.0
  %v162 = vsel %vm160, %v143, 0.0
  %v163 = vsel %vm160, %v146, 0.0
  %v164 = vsel %vm160, %v149, 0.0
  %v165 = vld [vmem:[%s5] sm:$0xff]
  %v166 = vld [vmem:[%s5 + $0x8] sm:$0xff]
  %v167 = vld [vmem:[%s5 + $0x10] sm:$0xff]
  %v168 = vld [vmem:[%s5 + $0x18] sm:$0xff]
  %169 = vadd.xlane.f32.xlu0 %v161
  %v170 = vpop.xlane.xlu0 %169
  %171 = vadd.xlane.f32.xlu0 %v162
  %v172 = vpop.xlane.xlu0 %171
  %173 = vadd.xlane.f32.xlu0 %v163
  %v174 = vpop.xlane.xlu0 %173
  %175 = vadd.xlane.f32.xlu0 %v164
  %v176 = vpop.xlane.xlu0 %175
  %v177 = vadd.f32 %v165, %v170
  %v178 = vadd.f32 %v166, %v172
  %v179 = vadd.f32 %v167, %v174
  %v180 = vadd.f32 %v168, %v176
  %vm181 = vcmask 7168
  %182 = vst.msk [vmem:[%s5] sm:$0xff] %vm181, %v177
  %183 = vst.msk [vmem:[%s5 + $0x8] sm:$0xff] %vm181, %v178
  %184 = vst.msk [vmem:[%s5 + $0x10] sm:$0xff] %vm181, %v179
  %185 = vst.msk [vmem:[%s5 + $0x18] sm:$0xff] %vm181, %v180
  %v186 = vld [vmem:[%s6] sm:$0xff]
  %v187 = vld [vmem:[%s6 + $0x8] sm:$0xff]
  %v188 = vld [vmem:[%s6 + $0x10] sm:$0xff]
  %v189 = vld [vmem:[%s6 + $0x18] sm:$0xff]
  %v190 = vmul.f32 %v161, %v161
  %v191 = vmul.f32 %v162, %v162
  %v192 = vmul.f32 %v163, %v163
  %v193 = vmul.f32 %v164, %v164
  %194 = vadd.xlane.f32.xlu0 %v190
  %v195 = vpop.xlane.xlu0 %194
  %196 = vadd.xlane.f32.xlu0 %v191
  %v197 = vpop.xlane.xlu0 %196
  %198 = vadd.xlane.f32.xlu0 %v192
  %v199 = vpop.xlane.xlu0 %198
  %200 = vadd.xlane.f32.xlu0 %v193
  %v201 = vpop.xlane.xlu0 %200
  %v202 = vadd.f32 %v186, %v195
  %v203 = vadd.f32 %v187, %v197
  %v204 = vadd.f32 %v188, %v199
  %v205 = vadd.f32 %v189, %v201
  %206 = vst.msk [vmem:[%s6] sm:$0xff] %vm181, %v202
  %207 = vst.msk [vmem:[%s6 + $0x8] sm:$0xff] %vm181, %v203
  %208 = vst.msk [vmem:[%s6 + $0x10] sm:$0xff] %vm181, %v204
  %209 = vst.msk [vmem:[%s6 + $0x18] sm:$0xff] %vm181, %v205
  // Predicated region
  $region22: #{topnet_forward.5} parent=0 // pred_check
    _
  $region23: #{topnet_forward.5} parent=0 // pred_check_branch
    %211 = sbr.rel (0) target = $region25
  $region24: #{topnet_forward.5} parent=0 // pred_region
    _
  $region25: #{topnet_forward.5} parent=0 // pred_fallthru
    _
  // Predicated region
  $region26: #{topnet_forward.5} parent=0 // pred_check
    _
  $region27: #{topnet_forward.5} parent=0 // pred_check_branch
    %213 = sbr.rel (0) target = $region29
  $region28: #{topnet_forward.5} parent=0 // pred_region
    _
  $region29: #{topnet_forward.5} parent=0 // pred_fallthru
    _
  // Predicated region
  $region30: #{topnet_forward.5} parent=0 // pred_check
    _
  $region31: #{topnet_forward.5} parent=0 // pred_check_branch
    %215 = sbr.rel (0) target = $region33
  $region32: #{topnet_forward.5} parent=0 // pred_region
    _
  $region33: #{topnet_forward.5} parent=0 // pred_fallthru
    _
  // Predicated region
  $region34: #{topnet_forward.5} parent=0 // pred_check
    _
  $region35: #{topnet_forward.5} parent=0 // pred_check_branch
    %217 = sbr.rel (0) target = $region37
  $region36: #{topnet_forward.5} parent=0 // pred_region
    _
  $region37: #{topnet_forward.5} parent=0 // pred_fallthru
    _
  // Predicated region
  $region38: #{topnet_forward.5} parent=0 // pred_check
    _
  $region39: #{topnet_forward.5} parent=0 // pred_check_branch
    %219 = sbr.rel (0) target = $region41
  $region40: #{topnet_forward.5} parent=0 // pred_region
    _
  $region41: #{topnet_forward.5} parent=0 // pred_fallthru
    _
  // Predicated region
  $region42: #{topnet_forward.5} parent=0 // pred_check
    _
  $region43: #{topnet_forward.5} parent=0 // pred_check_branch
    %221 = sbr.rel (0) target = $region45
  $region44: #{topnet_forward.5} parent=0 // pred_region
    _
  $region45: #{topnet_forward.5} parent=0 // pred_fallthru
    _

</llo_original>
